<compile_context>
chip_gen: v7x
topology: tpu7x:2x2x1
jax: 0.10.0
libtpu: 0.0.40
codegen_flags: <defaults>
</compile_context>

<pallas_src>
import jax
import jax.numpy as jnp
from jax.experimental import pallas as pl
from jax.experimental.pallas import tpu as pltpu

# ---------------- problem sizes (small, synthetic) ----------------
B = 16          # batch
D_IN = 64       # input features (d_in)
N_CLASS = 4     # classifier classes (n_class)

LANE = 128      # TPU lane width — output feature dim padded to this
SUBLANE = 8     # batch rows padded to a multiple of this


def classifier_kernel(x_ref, w_ref, b_ref, out_ref):
    # Single fused matmul + bias add on a lane-dense (B_pad, 128) output tile.
    # bf16 MXU inputs, f32 accumulation, f32 bias add on the VPU.
    out_ref[...] = (
        jnp.dot(x_ref[...].astype(jnp.bfloat16), w_ref[...],
                preferred_element_type=jnp.float32)
        + b_ref[...]
    )


def prep_params(w, b):
    """One-time prep (hoisted out of the hot path).

    torch nn.Linear layout W: (n_class, d_in), b: (n_class,)
      -> w_padded: (d_in, 128) bf16  (transposed, zero-padded lanes)
      -> b_row:    (1, 128)    f32   (zero-padded lanes)
    """
    n_class, d_in = w.shape
    n_pad = pl.cdiv(max(n_class, LANE), LANE) * LANE           # >= 128
    w_padded = jnp.zeros((d_in, n_pad), jnp.float32).at[:, :n_class].set(
        jnp.transpose(w).astype(jnp.float32)).astype(jnp.bfloat16)
    b_row = jnp.zeros((1, n_pad), jnp.float32).at[:, :n_class].set(
        b.astype(jnp.float32))
    return w_padded, b_row


def classifier_forward(x, w_padded, b_row):
    """out = x @ W^T + b, returned as a lane-dense padded slab.

    x:        (B, d_in)   f32
    w_padded: (d_in, 128) bf16   (pre-transposed / pre-padded, see prep_params)
    b_row:    (1, 128)    f32
    returns:  (B_pad, 128) f32 — caller slices [:B, :n_class].
    """
    bx, d_in = x.shape
    n_pad = w_padded.shape[1]

    # sublane-align the batch (no-op at B=16)
    b_pad = pl.cdiv(bx, SUBLANE) * SUBLANE
    x_p = x.astype(jnp.float32)
    if b_pad != bx:
        x_p = jnp.zeros((b_pad, d_in), jnp.float32).at[:bx].set(x_p)

    out = pl.pallas_call(
        classifier_kernel,
        out_shape=jax.ShapeDtypeStruct((b_pad, n_pad), jnp.float32),
        grid=(1,),                                            # single step
        in_specs=[
            pl.BlockSpec((b_pad, d_in), lambda i: (0, 0)),    # x (whole batch)
            pl.BlockSpec((d_in, n_pad), lambda i: (0, 0)),    # weight (VMEM-resident)
            pl.BlockSpec((1, n_pad), lambda i: (0, 0)),       # bias row
        ],
        out_specs=pl.BlockSpec((b_pad, n_pad), lambda i: (0, 0)),
    )(x_p, w_padded, b_row)
    return out


def init_params(key):
    """Match torch nn.Linear default init: U(-1/sqrt(d_in), 1/sqrt(d_in))."""
    kw, kb = jax.random.split(key)
    scale = 1.0 / jnp.sqrt(jnp.float32(D_IN))
    w = jax.random.uniform(kw, (N_CLASS, D_IN), jnp.float32, -scale, scale)
    b = jax.random.uniform(kb, (N_CLASS,), jnp.float32, -scale, scale)
    return w, b


if __name__ == "__main__":
    key = jax.random.PRNGKey(0)
    kx, kp = jax.random.split(key)
    x = jax.random.normal(kx, (B, D_IN), jnp.float32)
    w, b = init_params(kp)

    # one-time param prep (outside the hot path)
    w_padded, b_row = prep_params(w, b)

    forward = jax.jit(classifier_forward)
    out_padded = forward(x, w_padded, b_row)
    jax.block_until_ready(out_padded)

    # consumer-side slice back to the real logits
    logits = out_padded[:B, :N_CLASS]

    # plain-JAX reference with matching bf16-input / f32-accumulate semantics
    x_bf = x.astype(jnp.bfloat16).astype(jnp.float32)
    w_bf = w.astype(jnp.bfloat16).astype(jnp.float32)
    logits_ref = x_bf @ w_bf.T + b

    assert logits.shape == (B, N_CLASS)
    assert jnp.allclose(logits, logits_ref, atol=1e-4, rtol=1e-4), (
        float(jnp.max(jnp.abs(logits - logits_ref))))
    # padded lanes/rows carry exact zero logits (zero weight cols + zero bias)
    assert jnp.all(out_padded[:, N_CLASS:] == 0.0)

    print("KERNEL_OK")
</pallas_src>

<mosaic_0001>
module attributes {stable_mosaic.version = 11 : i64} {
  func.func @classifier_kernel(%arg0: i32, %arg1: memref<16x64xf32, #tpu.memory_space<vmem>>, %arg2: memref<64x128xbf16, #tpu.memory_space<vmem>>, %arg3: memref<1x128xf32, #tpu.memory_space<vmem>>, %arg4: memref<16x128xf32, #tpu.memory_space<vmem>>) attributes {dimension_semantics = [#tpu.dimension_semantics<arbitrary>], iteration_bounds = array<i64: 1>, scalar_prefetch = 0 : i64, scratch_operands = 0 : i64, tpu.core_type = #tpu.core_type<tc>, window_params = [{pipeline_mode = #tpu.pipeline_mode<synchronous>, transform_indices = @transform_0, window_bounds = array<i64: 16, 64>}, {pipeline_mode = #tpu.pipeline_mode<synchronous>, transform_indices = @transform_1, window_bounds = array<i64: 64, 128>}, {pipeline_mode = #tpu.pipeline_mode<synchronous>, transform_indices = @transform_2, window_bounds = array<i64: 1, 128>}, {pipeline_mode = #tpu.pipeline_mode<synchronous>, transform_indices = @transform_3, window_bounds = array<i64: 16, 128>}]} {
    %c0 = arith.constant 0 : index
    %c0_0 = arith.constant 0 : index
    %0 = vector.load %arg1[%c0, %c0_0] : memref<16x64xf32, #tpu.memory_space<vmem>>, vector<16x64xf32>
    %1 = arith.truncf %0 : vector<16x64xf32> to vector<16x64xbf16>
    %c0_1 = arith.constant 0 : index
    %c0_2 = arith.constant 0 : index
    %2 = vector.load %arg2[%c0_1, %c0_2] : memref<64x128xbf16, #tpu.memory_space<vmem>>, vector<64x128xbf16>
    %cst = arith.constant dense<0.000000e+00> : vector<16x128xf32>
    %3 = tpu.matmul %1, %2, %cst {dimension_numbers = #tpu.dot_dimension_numbers<[1], [0], [0], [1], [0, 0, 1, 1], [], []>} : vector<16x64xbf16>, vector<64x128xbf16>, vector<16x128xf32> -> vector<16x128xf32>
    %c0_3 = arith.constant 0 : index
    %c0_4 = arith.constant 0 : index
    %4 = vector.load %arg3[%c0_3, %c0_4] : memref<1x128xf32, #tpu.memory_space<vmem>>, vector<1x128xf32>
    %5 = vector.broadcast %4 : vector<1x128xf32> to vector<16x128xf32>
    %6 = arith.addf %3, %5 : vector<16x128xf32>
    %c0_5 = arith.constant 0 : index
    %c0_6 = arith.constant 0 : index
    %7 = vector.load %arg4[%c0_5, %c0_6] : memref<16x128xf32, #tpu.memory_space<vmem>>, vector<16x128xf32>
    tpu.vector_store %arg4[%c0_5, %c0_6], %6 {strides = array<i32>} : memref<16x128xf32, #tpu.memory_space<vmem>>, vector<16x128xf32>,
    return
  }
  func.func @transform_0(%arg0: i32) -> (i32, i32) {
    %c0_i32 = arith.constant 0 : i32
    %c0_i32_0 = arith.constant 0 : i32
    %c0_i32_1 = arith.constant 0 : i32
    return %c0_i32, %c0_i32_0 : i32, i32
  }
  func.func @transform_1(%arg0: i32) -> (i32, i32) {
    %c0_i32 = arith.constant 0 : i32
    %c0_i32_0 = arith.constant 0 : i32
    %c0_i32_1 = arith.constant 0 : i32
    return %c0_i32, %c0_i32_0 : i32, i32
  }
  func.func @transform_2(%arg0: i32) -> (i32, i32) {
    %c0_i32 = arith.constant 0 : i32
    %c0_i32_0 = arith.constant 0 : i32
    %c0_i32_1 = arith.constant 0 : i32
    return %c0_i32, %c0_i32_0 : i32, i32
  }
  func.func @transform_3(%arg0: i32) -> (i32, i32) {
    %c0_i32 = arith.constant 0 : i32
    %c0_i32_0 = arith.constant 0 : i32
    %c0_i32_1 = arith.constant 0 : i32
    return %c0_i32, %c0_i32_0 : i32, i32
  }
}

</mosaic_0001>

<llo_original>
// kernel: classifier_forward.1
$region0: #{classifier_forward.1}
  #allocation0 [shape = 'u32[]', space=smem, size = 0x4, offset = 0x4, fixed_abs, tag = 'smem constant byte address 0x4 - core index']
  #allocation1 [shape = 'u32[144,128]{1,0:T(1,128)}', space=vmem, size = 0x12000, scoped, tag = 'internal scratch']
  %s0 = inlined_call_operand.hbm [shape: f32[16,64], index: 0, kind: input, shape index: {}]
  %s1 = inlined_call_operand.hbm [shape: bf16[64,128], index: 1, kind: input, shape index: {}]
  %s2 = inlined_call_operand.vmem [shape: f32[1,128], index: 2, kind: input, shape index: {}]
  %s3 = inlined_call_operand.hbm [shape: f32[16,128], index: 3, kind: output, shape index: {}]
  %s4 = sld [smem:[#allocation0]]
  $region30: #{classifier_forward.1} parent=0
    _
  %s6 = ssub.s32 1, %s4
  %s7 = scalar_select 0, %s6, %s4
  $region1: #{classifier_forward.1} parent=0
    #allocation2 [shape = 'u8[8192]{0}', space=vmem, size = 0x2000, scoped, tag = 'input window, operand 0, single buffered']
    #allocation3 [shape = 's32[1]{0}', space=sflag, size = 0x4, scoped, tag = 'scoped memory for classifier_forward.1']
    #allocation4 [shape = 's32[1]{0}', space=sflag, size = 0x4, scoped, tag = 'scoped memory for classifier_forward.1']
    #allocation5 [shape = 'u8[16384]{0}', space=vmem, size = 0x4000, scoped, tag = 'input window, operand 1, single buffered']
    #allocation6 [shape = 's32[1]{0}', space=sflag, size = 0x4, scoped, tag = 'scoped memory for classifier_forward.1']
    #allocation7 [shape = 'u8[8192]{0}', space=vmem, size = 0x2000, scoped, tag = 'output window, operand 0, single buffered']
    %8 = vsyncpa [#allocation3], 0
    %9 = vsyncpa [#allocation6], 0
    %10 = vsyncpa [#allocation4], 0
    // Predicated region
    $region2: #{classifier_forward.1} parent=1 // pred_check
      _
    $region3: #{classifier_forward.1} parent=1 // pred_check_branch
      %12 = sbr.rel (0) target = $region5
    $region4: #{classifier_forward.1} parent=1 // pred_region
      %s14 = ssub.s32 256, 256
      %15 = vsyncadd [#allocation3], %s14
      %s16 = sshll.u32 [#allocation2], 4
      %s17 = int_to_ptr.vmem [resolvable:$true] %s16
      %22 = dma.hbm_to_vmem [thread:$0]  %s0, 256, %s17, [#allocation3], 128, 128, 8
    $region5: #{classifier_forward.1} parent=1 // pred_fallthru
      _
    // Predicated region
    $region6: #{classifier_forward.1} parent=1 // pred_check
      _
    $region7: #{classifier_forward.1} parent=1 // pred_check_branch
      %24 = sbr.rel (0) target = $region9
    $region8: #{classifier_forward.1} parent=1 // pred_region
      %s26 = ssub.s32 512, 512
      %27 = vsyncadd [#allocation6], %s26
      %s28 = sshll.u32 [#allocation5], 4
      %s29 = int_to_ptr.vmem [resolvable:$true] %s28
      %34 = dma.hbm_to_vmem [thread:$0]  %s1, 512, %s29, [#allocation6], 64, 64, 4
    $region9: #{classifier_forward.1} parent=1 // pred_fallthru
      _
    // Predicated region
    $region10: #{classifier_forward.1} parent=1 // pred_check
      _
    $region11: #{classifier_forward.1} parent=1 // pred_check_branch
      %36 = sbr.rel (0) target = $region13
    $region12: #{classifier_forward.1} parent=1 // pred_region
      _
    $region13: #{classifier_forward.1} parent=1 // pred_fallthru
      _
    // Predicated region
    $region14: #{classifier_forward.1} parent=1 // pred_check
      _
    $region15: #{classifier_forward.1} parent=1 // pred_check_branch
      %38 = sbr.rel (0) target = $region17
    $region16: #{classifier_forward.1} parent=1 // pred_region
      %39 = dma.done [#allocation3], 256
    $region17: #{classifier_forward.1} parent=1 // pred_fallthru
      _
    // Predicated region
    $region18: #{classifier_forward.1} parent=1 // pred_check
      _
    $region19: #{classifier_forward.1} parent=1 // pred_check_branch
      %41 = sbr.rel (0) target = $region21
    $region20: #{classifier_forward.1} parent=1 // pred_region
      %42 = dma.done [#allocation6], 512
    $region21: #{classifier_forward.1} parent=1 // pred_fallthru
      _
    %v44 = vld [vmem:[#allocation2] sm:$0xff]
    %v45 = vld [vmem:[#allocation2 + $0x8] sm:$0xff]
    %v46 = vpack.c.bf16 %v45, %v44
    %v47 = vld [vmem:[#allocation5] sm:$0xf]
    %v48 = vld [vmem:[#allocation5 + $0x4] sm:$0xf]
    %v49 = vld [vmem:[#allocation5 + $0x8] sm:$0xf]
    %v50 = vld [vmem:[#allocation5 + $0xc] sm:$0xf]
    %v51 = vld [vmem:[#allocation5 + $0x10] sm:$0xf]
    %v52 = vld [vmem:[#allocation5 + $0x14] sm:$0xf]
    %v53 = vld [vmem:[#allocation5 + $0x18] sm:$0xf]
    %v54 = vld [vmem:[#allocation5 + $0x1c] sm:$0xf]
    %v55 = vld [vmem:[%s2] sm:$0x1]
    %v57 = vlaneseq
    %v58 = vshrl.u32 %v57, 7
    %v59 = vsub.s32 0, %v58
    %v60 = vrot.slane %v55, %v59
    %v70 = vunpack.c.l.b16 %v47
    %v71 = vunpack.c.l.b16 %v48
    %v72 = vunpack.c.l.b16 %v49
    %v73 = vunpack.c.l.b16 %v50
    %v74 = vunpack.c.l.b16 %v51
    %v75 = vunpack.c.l.b16 %v52
    %v76 = vunpack.c.l.b16 %v53
    %v77 = vunpack.c.l.b16 %v54
    %v78 = vpack.c.b16 %v71, %v70
    %v79 = vpack.c.b16 %v73, %v72
    %v80 = vpack.c.b16 %v75, %v74
    %v81 = vpack.c.b16 %v77, %v76
    %vm86 = vcmask 523264
    %v88 = vsel %vm86, %v46, 0
    %90 = vmatprep.subr.bf16.mxu0 0
    %91 = vmatpush1.bf16.msra.mxu0 %v78
    %92 = vmatprep.subr.bf16.mxu0 0
    %93 = vmatpush1.bf16.msra.mxu0 %v79
    %94 = vmatprep.subr.bf16.mxu0 0
    %95 = vmatpush1.bf16.msra.mxu0 %v80
    %96 = vmatprep.subr.bf16.mxu0 0
    %97 = vmatpush1.bf16.msra.mxu0 %v81
    %98 = vmatprep.subr.bf16.mxu0 0
    %99 = vmatpush1.bf16.msra.mxu0 0
    %100 = vmatprep.subr.bf16.mxu0 0
    %101 = vmatpush1.bf16.msra.mxu0 0
    %102 = vmatprep.subr.bf16.mxu0 0
    %103 = vmatpush1.bf16.msra.mxu0 0
    %104 = vmatprep.subr.bf16.mxu0 0
    %105 = vmatpush1.bf16.msra.mxu0 0
    %106 = vmatprep.subr.bf16.mxu0 0
    %107 = vmatpush1.bf16.msra.mxu0 0
    %108 = vmatprep.subr.bf16.mxu0 0
    %109 = vmatpush1.bf16.msra.mxu0 0
    %110 = vmatprep.subr.bf16.mxu0 0
    %111 = vmatpush1.bf16.msra.mxu0 0
    %112 = vmatprep.subr.bf16.mxu0 0
    %113 = vmatpush1.bf16.msra.mxu0 0
    %114 = vmatprep.subr.bf16.mxu0 0
    %115 = vmatpush1.bf16.msra.mxu0 0
    %116 = vmatprep.subr.bf16.mxu0 0
    %117 = vmatpush1.bf16.msra.mxu0 0
    %118 = vmatprep.subr.bf16.mxu0 0
    %119 = vmatpush1.bf16.msra.mxu0 0
    %120 = vmatprep.subr.bf16.mxu0 0
    %121 = vmatpush1.bf16.msra.mxu0 0
    %122 = vmatprep.mubr.bf16.mxu0 0
    %123 = vmatmul.mubr.bf16.gmra.mrb[0].mxu0 %v88
    %v124 = vpop.f32.mrb[0].mxu0
    %v125 = vadd.f32 %v60, %v124
    %v126 = vpop.f32.mrb[0].mxu0
    %v127 = vpop.f32.mrb[0].mxu0
    %v128 = vadd.f32 %v60, %v127
    %v129 = vpop.f32.mrb[0].mxu0
    %130 = vdwg.mxu0
    %131 = vst [vmem:[#allocation7] sm:$0xff] %v125
    %132 = vst [vmem:[#allocation7 + $0x8] sm:$0xff] %v128
    // Predicated region
    $region22: #{classifier_forward.1} parent=1 // pred_check
      _
    $region23: #{classifier_forward.1} parent=1 // pred_check_branch
      %134 = sbr.rel (0) target = $region25
    $region24: #{classifier_forward.1} parent=1 // pred_region
      %s136 = ssub.s32 256, 256
      %137 = vsyncadd [#allocation4], %s136
      %s138 = sshll.u32 [#allocation7], 4
      %s139 = int_to_ptr.vmem [resolvable:$true] %s138
      %144 = dma.vmem_to_hbm [thread:$0]  %s139, 256, %s3, [#allocation4], 128, 128, 8
    $region25: #{classifier_forward.1} parent=1 // pred_fallthru
      _
    // Predicated region
    $region26: #{classifier_forward.1} parent=1 // pred_check
      _
    $region27: #{classifier_forward.1} parent=1 // pred_check_branch
      %146 = sbr.rel (0) target = $region29
    $region28: #{classifier_forward.1} parent=1 // pred_region
      %147 = dma.done [#allocation4], 256
    $region29: #{classifier_forward.1} parent=1 // pred_fallthru
      _
    %148 = vsyncpa [#allocation3], 1
    %149 = vsyncpa [#allocation6], 1
    %150 = vsyncpa [#allocation4], 1

</llo_original>
